<compile_context>
chip_gen: v7x
topology: tpu7x:2x2x1
jax: 0.10.0
libtpu: 0.0.40
codegen_flags: <defaults>
</compile_context>

<pallas_src>
import functools

import numpy as np
import jax
import jax.numpy as jnp
from jax import lax
from jax.experimental import pallas as pl
from jax.experimental.pallas import tpu as pltpu


@functools.lru_cache(maxsize=None)
def _vmem_limit_bytes():
    """~75% of physical VMEM, capped at 100 MiB: 96 MiB on v5e/v6e, 48 MiB on v7x."""
    cap = 64 * 1024 * 1024
    try:
        info = pltpu.get_tpu_info()
        cap = int(getattr(info, "vmem_capacity_bytes", cap) or cap)
    except Exception:
        pass
    return min(int(cap * 0.75), 100 * 1024 * 1024)


def _cparams(*sem):
    return pltpu.CompilerParams(dimension_semantics=tuple(sem),
                                vmem_limit_bytes=_vmem_limit_bytes())


def _pick_block(n, preferred=512, align=8):
    """Largest power-of-two tile <= preferred that divides n (>= align); else full n.
    A full-extent block is always a legal BlockSpec regardless of dtype tiling."""
    t = preferred
    while t >= align:
        if t <= n and n % t == 0:
            return t
        t //= 2
    return n


# ------------------------------ Pallas kernels ------------------------------

def _linear_kernel(x_ref, w_ref, b_ref, o_ref):
    # One lane-dense matmul per row tile; f32 accumulate, cast at the store.
    acc = jnp.dot(x_ref[...], w_ref[...], preferred_element_type=jnp.float32) + b_ref[...]
    o_ref[...] = acc.astype(o_ref.dtype)


def _attn_kernel(q_ref, kv_ref, o_ref, mask_ref, *, scale, thresh, num_heads, head_dim):
    # q_ref:   (TQ, 3*H*D) bf16 row tile of the fused QKV projection
    # kv_ref:  (N,  3*H*D) bf16 full (K/V column ranges read per head)
    # o_ref:   (TQ, H*D)   f32  attention output, already in torch [N, H*D] layout
    # mask_ref:(H,  TQ, N) int8 fused (softmax > thresh) strip
    hd = num_heads * head_dim
    for h in range(num_heads):                       # static unroll (H is small)
        q = q_ref[:, h * head_dim:(h + 1) * head_dim]                       # (TQ, D) bf16
        k = kv_ref[:, hd + h * head_dim: hd + (h + 1) * head_dim]           # (N, D)  bf16
        v = kv_ref[:, 2 * hd + h * head_dim: 2 * hd + (h + 1) * head_dim]   # (N, D)  bf16
        s = lax.dot_general(q, k, (((1,), (1,)), ((), ())),
                            preferred_element_type=jnp.float32) * scale     # (TQ, N) f32
        m = jnp.max(s, axis=-1, keepdims=True)                              # stable softmax
        e = jnp.exp(s - m)                                                  # unnormalized
        l = jnp.sum(e, axis=-1, keepdims=True)
        # Exact threshold without normalizing the whole strip: a > t  <=>  e > t*l.
        mask_ref[h, :, :] = (e > thresh * l).astype(jnp.int8)
        # Normalize the small (TQ, D) output instead of the (TQ, N) strip (EUP recip).
        o = jnp.dot(e.astype(jnp.bfloat16), v, preferred_element_type=jnp.float32)
        o_ref[:, h * head_dim:(h + 1) * head_dim] = o * pl.reciprocal(l, approx=True)
    # TODO(synk): for very large N on v7x (64 MiB VMEM) switch the full-N strip to a
    # KV-tiled online-softmax (second grid axis over KV blocks).


def _gcn_agg_kernel(a_ref, y_ref, b_ref, wp_ref, h_ref, hp_ref, acc_ref):
    # h = A_norm @ Y + b accumulated over A column tiles (bf16 inputs, f32 acc); fused
    # pooling pre-projection hp = h @ W_pool in the final-k epilogue.
    k = pl.program_id(1)

    @pl.when(k == 0)
    def _():
        acc_ref[...] = jnp.zeros_like(acc_ref)

    acc_ref[...] += jnp.dot(a_ref[...], y_ref[...], preferred_element_type=jnp.float32)

    @pl.when(k == pl.num_programs(1) - 1)
    def _():
        h = acc_ref[...] + b_ref[...]
        h_ref[...] = h
        hp_ref[...] = jnp.dot(h, wp_ref[...],
                              preferred_element_type=jnp.float32).astype(hp_ref.dtype)


def _score_agg_kernel(a_ref, y_ref, b_ref, s_ref, acc_ref):
    # SAGPooling score = tanh(A_norm @ (h @ W_pool) + b_pool); tanh fused (EUP).
    k = pl.program_id(1)

    @pl.when(k == 0)
    def _():
        acc_ref[...] = jnp.zeros_like(acc_ref)

    acc_ref[...] += jnp.dot(a_ref[...], y_ref[...], preferred_element_type=jnp.float32)

    @pl.when(k == pl.num_programs(1) - 1)
    def _():
        s_ref[...] = jnp.tanh(acc_ref[...] + b_ref[...])


def _head_kernel(x_ref, s_ref, g_ref, b_ref, w_ref, wb_ref, o_ref):
    # SAGPooling feature scaling (score * multiplier folded into s) -> LayerNorm
    # -> ReLU -> prediction-head Linear, fused per row tile.
    x = x_ref[...] * s_ref[...]
    mean = jnp.mean(x, axis=-1, keepdims=True)
    var = jnp.mean(jnp.square(x - mean), axis=-1, keepdims=True)
    xn = (x - mean) * lax.rsqrt(var + 1e-5)
    xn = xn * g_ref[...] + b_ref[...]
    xn = jnp.maximum(xn, 0.0)                        # ReLU
    # TODO(synk): dropout applied in eval mode (identity); training-mode RNG dropout omitted.
    o_ref[...] = (jnp.dot(xn, w_ref[...], preferred_element_type=jnp.float32)
                  + wb_ref[...])


# ------------------------------ pallas_call wrappers ------------------------------

def linear_pallas(x, w, b, *, block_rows=None, out_dtype=jnp.float32):
    n, din = x.shape
    dout = w.shape[1]
    align = 16 if out_dtype == jnp.bfloat16 else 8
    tr = block_rows
    if tr is None or n % tr or (tr % align and tr != n):
        tr = _pick_block(n, preferred=512, align=align)
    return pl.pallas_call(
        _linear_kernel,
        grid=(n // tr,),
        in_specs=[pl.BlockSpec((tr, din), lambda i: (i, 0)),
                  pl.BlockSpec((din, dout), lambda i: (0, 0)),
                  pl.BlockSpec((1, dout), lambda i: (0, 0))],
        out_specs=pl.BlockSpec((tr, dout), lambda i: (i, 0)),
        out_shape=jax.ShapeDtypeStruct((n, dout), out_dtype),
        compiler_params=_cparams("parallel"),
    )(x, w, b.reshape(1, dout))


def attention_pallas(qkv_bf16, *, num_heads, head_dim, block_q=None, thresh=0.5):
    n = qkv_bf16.shape[0]
    hd = num_heads * head_dim
    tq = block_q
    # int8 mask strip needs a 32-multiple sublane tile (or the full extent).
    if tq is None or n % tq or (tq % 32 and tq != n):
        tq = _pick_block(n, preferred=256, align=32)
    kernel = functools.partial(_attn_kernel, scale=1.0 / (head_dim ** 0.5),
                               thresh=thresh, num_heads=num_heads, head_dim=head_dim)
    return pl.pallas_call(
        kernel,
        grid=(n // tq,),
        in_specs=[pl.BlockSpec((tq, 3 * hd), lambda i: (i, 0)),      # q rows of fused QKV
                  pl.BlockSpec((n, 3 * hd), lambda i: (0, 0))],      # K/V resident (bf16)
        out_specs=(pl.BlockSpec((tq, hd), lambda i: (i, 0)),
                   pl.BlockSpec((num_heads, tq, n), lambda i: (0, i, 0))),
        out_shape=(jax.ShapeDtypeStruct((n, hd), jnp.float32),
                   jax.ShapeDtypeStruct((num_heads, n, n), jnp.int8)),
        compiler_params=_cparams("parallel"),
    )(qkv_bf16, qkv_bf16)


def _gcn_tiles(n, block_rows, block_k):
    tm = block_rows
    if tm is None or n % tm or (tm % 16 and tm != n):            # bf16 A rows: 16-multiple
        tm = _pick_block(n, preferred=512, align=16)
    tk = block_k
    if tk is None or n % tk or (tk % 128 and tk != n):           # lane dim: 128-multiple
        tk = _pick_block(n, preferred=512, align=128)
    # TODO(synk): pad N to a 128-multiple host-side so tk never falls back to full N.
    return tm, tk


def gcn_agg_pallas(a_norm_bf16, y_bf16, b, w_pool, *, block_rows=None, block_k=None):
    n = a_norm_bf16.shape[0]
    c = y_bf16.shape[1]
    tm, tk = _gcn_tiles(n, block_rows, block_k)
    return pl.pallas_call(
        _gcn_agg_kernel,
        grid=(n // tm, n // tk),
        in_specs=[pl.BlockSpec((tm, tk), lambda i, kk: (i, kk)),
                  pl.BlockSpec((tk, c), lambda i, kk: (kk, 0)),
                  pl.BlockSpec((1, c), lambda i, kk: (0, 0)),
                  pl.BlockSpec((c, 1), lambda i, kk: (0, 0))],
        out_specs=(pl.BlockSpec((tm, c), lambda i, kk: (i, 0)),
                   pl.BlockSpec((tm, 1), lambda i, kk: (i, 0))),
        out_shape=(jax.ShapeDtypeStruct((n, c), jnp.float32),
                   jax.ShapeDtypeStruct((n, 1), jnp.bfloat16)),
        scratch_shapes=[pltpu.VMEM((tm, c), jnp.float32)],
        compiler_params=_cparams("parallel", "arbitrary"),
    )(a_norm_bf16, y_bf16, b.reshape(1, c), w_pool)


def score_agg_pallas(a_norm_bf16, hp_bf16, b, *, block_rows=None, block_k=None):
    n = a_norm_bf16.shape[0]
    tm, tk = _gcn_tiles(n, block_rows, block_k)
    return pl.pallas_call(
        _score_agg_kernel,
        grid=(n // tm, n // tk),
        in_specs=[pl.BlockSpec((tm, tk), lambda i, kk: (i, kk)),
                  pl.BlockSpec((tk, 1), lambda i, kk: (kk, 0)),
                  pl.BlockSpec((1, 1), lambda i, kk: (0, 0))],
        out_specs=pl.BlockSpec((tm, 1), lambda i, kk: (i, 0)),
        out_shape=jax.ShapeDtypeStruct((n, 1), jnp.float32),
        scratch_shapes=[pltpu.VMEM((tm, 1), jnp.float32)],
        compiler_params=_cparams("parallel", "arbitrary"),
    )(a_norm_bf16, hp_bf16, b.reshape(1, 1))


def head_pallas(x, s, ln_g, ln_b, w, b, *, block_rows=256):
    m, c = x.shape
    dout = w.shape[1]
    tr = block_rows
    m_pad = ((m + tr - 1) // tr) * tr
    if m_pad != m:                       # pad rows (sliced off after the call)
        x = jnp.pad(x, ((0, m_pad - m), (0, 0)))
        s = jnp.pad(s, ((0, m_pad - m), (0, 0)))
    y = pl.pallas_call(
        _head_kernel,
        grid=(m_pad // tr,),
        in_specs=[pl.BlockSpec((tr, c), lambda i: (i, 0)),
                  pl.BlockSpec((tr, 1), lambda i: (i, 0)),
                  pl.BlockSpec((1, c), lambda i: (0, 0)),
                  pl.BlockSpec((1, c), lambda i: (0, 0)),
                  pl.BlockSpec((c, dout), lambda i: (0, 0)),
                  pl.BlockSpec((1, dout), lambda i: (0, 0))],
        out_specs=pl.BlockSpec((tr, dout), lambda i: (i, 0)),
        out_shape=jax.ShapeDtypeStruct((m_pad, dout), jnp.float32),
        compiler_params=_cparams("parallel"),
    )(x, s, ln_g.reshape(1, c), ln_b.reshape(1, c), w, b.reshape(1, dout))
    return y[:m]


# --------------------------- host-side graph glue ---------------------------

def _gcn_norm_dense(edge_index, num_nodes):
    """Dense A_norm exactly as PyG gcn_norm: add_remaining_self_loops (drops existing
    self loops, adds one per node), deg over target, symmetric norm. Returned bf16 so
    both GCN passes stream the dominant N^2 operand at half the HBM bandwidth."""
    ei = np.asarray(edge_index, dtype=np.int64)
    keep = ei[0] != ei[1]
    ei = ei[:, keep]
    loops = np.stack([np.arange(num_nodes)] * 2)
    ei = np.concatenate([ei, loops], axis=1)
    row, col = ei
    w = np.ones(ei.shape[1], np.float32)
    deg = np.zeros(num_nodes, np.float32)
    np.add.at(deg, col, w)
    dinv = np.where(deg > 0, 1.0 / np.sqrt(np.maximum(deg, 1e-12)), 0.0).astype(np.float32)
    norm = dinv[row] * w * dinv[col]
    a = np.zeros((num_nodes, num_nodes), np.float32)
    np.add.at(a, (col, row), norm)          # out[i] += norm * x[j] for edge j->i
    return jnp.asarray(a).astype(jnp.bfloat16)


def _topk_perm(score, ratio, batch):
    perm = []
    for g in np.unique(batch):
        idx = np.where(batch == g)[0]
        k = int(np.ceil(ratio * len(idx)))
        order = np.argsort(-score[idx], kind="stable")[:k]
        perm.append(idx[order])
    return np.concatenate(perm)


def _filter_adj(edge_index, perm, num_nodes):
    remap = np.full(num_nodes, -1, np.int64)
    remap[perm] = np.arange(len(perm))
    row, col = edge_index
    keep = (remap[row] >= 0) & (remap[col] >= 0)
    return np.stack([remap[row][keep], remap[col][keep]])


# --------------------------------- forward ----------------------------------

def self_attention_sag_forward(x, batch, params, *, num_heads, hidden,
                               ratio=0.5, multiplier=1.0,
                               block_rows=None, block_k=None, block_q=None):
    n = x.shape[0]

    # --- SelfAttention: fused QKV projection (bf16 -> half K/V DMA) + per-head softmax ---
    wqkv = jnp.concatenate([params["wq"], params["wk"], params["wv"]], axis=1)
    bqkv = jnp.concatenate([params["bq"], params["bk"], params["bv"]], axis=0)
    qkv = linear_pallas(x, wqkv, bqkv, block_rows=block_rows,
                        out_dtype=jnp.bfloat16)                    # [N, 3*H*D] bf16

    out, mask = attention_pallas(qkv, num_heads=num_heads, head_dim=hidden,
                                 block_q=block_q)                  # [N,H*D] f32, [H,N,N] i8

    # --- edge_index construction (mirrors torch: graph_attn_weights[0] keeps ALL heads,
    # restricted to graph-0 nodes). Only that int8 sub-block is moved to host. ---
    batch_np = np.asarray(batch)
    uniq = np.unique(batch_np)
    idx0 = np.where(batch_np == uniq[0])[0]
    idx0_dev = jnp.asarray(idx0.astype(np.int32))
    binary = np.asarray(jax.device_get(
        jnp.take(jnp.take(mask, idx0_dev, axis=1), idx0_dev, axis=2)))   # [H, n0, n0] int8

    nz = np.argwhere(binary != 0).T                      # == .nonzero(as_tuple=False).t()
    if nz.shape[1] == 0:
        edge_index = np.stack([np.arange(n), np.arange(n)], axis=0)
    else:
        edge_index = nz.reshape(2, -1)                   # == .view(2, -1)
    edge_index = np.concatenate(                         # add_self_loops
        [edge_index, np.stack([np.arange(n), np.arange(n)], axis=0)], axis=1)

    # --- one GCN + SAGPooling + LayerNorm block (num_pooling_layers = 1) ---
    a_norm = _gcn_norm_dense(edge_index, n)                        # bf16 dense A_norm

    xw = linear_pallas(out, params["gcn_w"], jnp.zeros((hidden,), jnp.float32),
                       block_rows=block_rows, out_dtype=jnp.bfloat16)  # X @ W_gcn (bf16)
    h, hp = gcn_agg_pallas(a_norm, xw, params["gcn_b"], params["pool_w"],
                           block_rows=block_rows, block_k=block_k)     # h f32, h@W_pool bf16
    score = score_agg_pallas(a_norm, hp, params["pool_b"],
                             block_rows=block_rows, block_k=block_k)   # tanh fused, [N,1]

    score_np = np.asarray(jax.device_get(score)).reshape(-1)       # tiny host transfer
    perm = _topk_perm(score_np, ratio, batch_np)
    perm_dev = jnp.asarray(perm.astype(np.int32))
    h_pool = jnp.take(h, perm_dev, axis=0)                         # gather stays on device
    s_pool = jnp.take(score, perm_dev, axis=0) * multiplier
    batch_pool = batch_np[perm]
    edge_index_pool = _filter_adj(edge_index, perm, n)             # unused (1 pooling layer)

    # score-scaling -> LayerNorm -> ReLU -> Dropout(eval) -> prediction head (fused)
    y = head_pallas(h_pool, s_pool, params["ln_g"], params["ln_b"],
                    params["pred_w"], params["pred_b"])
    return y, batch_pool, edge_index_pool


# ----------------------------- parameter setup ------------------------------

def _init_params(key, in_ch, hidden, out_ch, num_heads):
    keys = jax.random.split(key, 10)
    hd = hidden * num_heads

    def lin(k, fan_in, shape, scale=1.0):
        bound = scale / np.sqrt(fan_in)
        return jax.random.uniform(k, shape, jnp.float32, -bound, bound)

    # Q/K projections use a small scale so the synthetic example stays on a numerically
    # benign path (attention weights well below the 0.5 threshold -> self-loop fallback).
    return dict(
        wq=lin(keys[0], in_ch, (in_ch, hd), 0.2), bq=lin(keys[1], in_ch, (hd,), 0.2),
        wk=lin(keys[2], in_ch, (in_ch, hd), 0.2), bk=lin(keys[3], in_ch, (hd,), 0.2),
        wv=lin(keys[4], in_ch, (in_ch, hd)),      bv=lin(keys[5], in_ch, (hd,)),
        gcn_w=lin(keys[6], hd, (hd, hidden)),     gcn_b=jnp.zeros((hidden,), jnp.float32),
        pool_w=lin(keys[7], hidden, (hidden, 1)), pool_b=jnp.zeros((1,), jnp.float32),
        ln_g=jnp.ones((hidden,), jnp.float32),    ln_b=jnp.zeros((hidden,), jnp.float32),
        pred_w=lin(keys[8], hidden, (hidden, out_ch)),
        pred_b=lin(keys[9], hidden, (out_ch,)),
    )


if __name__ == "__main__":
    IN_CH, HIDDEN, OUT_CH, HEADS = 16, 32, 4, 2
    NODES_PER_GRAPH, NUM_GRAPHS = 128, 2
    N = NODES_PER_GRAPH * NUM_GRAPHS                               # 256 nodes, 2 graphs
    batch = np.repeat(np.arange(NUM_GRAPHS, dtype=np.int32), NODES_PER_GRAPH)

    key = jax.random.PRNGKey(0)
    kx, kp = jax.random.split(key)
    x = jax.random.normal(kx, (N, IN_CH), jnp.float32)
    params = _init_params(kp, IN_CH, HIDDEN, OUT_CH, HEADS)

    # 128-sized tiles exercise multi-step grids: attention grid (2,), GCN grids (2, 2),
    # while satisfying bf16(16)/int8(32)/lane(128) tiling alignment.
    y, batch_pool, ei_pool = self_attention_sag_forward(
        x, batch, params, num_heads=HEADS, hidden=HIDDEN,
        ratio=0.5, multiplier=1.0, block_rows=128, block_k=128, block_q=128)
    jax.block_until_ready(y)

    expected_rows = NUM_GRAPHS * int(np.ceil(0.5 * NODES_PER_GRAPH))   # ceil(0.5*128)*2
    assert y.shape == (expected_rows, OUT_CH), y.shape
    assert batch_pool.shape == (expected_rows,)
    assert bool(jnp.all(jnp.isfinite(y)))
    print("KERNEL_OK")
</pallas_src>

<mosaic_0001>
module attributes {stable_mosaic.version = 11 : i64} {
  func.func @_linear_kernel(%arg0: i32, %arg1: memref<128x16xf32, #tpu.memory_space<vmem>>, %arg2: memref<16x192xf32, #tpu.memory_space<vmem>>, %arg3: memref<1x192xf32, #tpu.memory_space<vmem>>, %arg4: memref<128x192xbf16, #tpu.memory_space<vmem>>) attributes {dimension_semantics = [#tpu.dimension_semantics<parallel>], iteration_bounds = array<i64: 2>, scalar_prefetch = 0 : i64, scratch_operands = 0 : i64, tpu.core_type = #tpu.core_type<tc>, window_params = [{transform_indices = @transform_0, window_bounds = array<i64: 128, 16>}, {pipeline_mode = #tpu.pipeline_mode<synchronous>, transform_indices = @transform_1, window_bounds = array<i64: 16, 192>}, {pipeline_mode = #tpu.pipeline_mode<synchronous>, transform_indices = @transform_2, window_bounds = array<i64: 1, 192>}, {transform_indices = @transform_3, window_bounds = array<i64: 128, 192>}]} {
    %c0 = arith.constant 0 : index
    %c0_0 = arith.constant 0 : index
    %0 = vector.load %arg1[%c0, %c0_0] : memref<128x16xf32, #tpu.memory_space<vmem>>, vector<128x16xf32>
    %c0_1 = arith.constant 0 : index
    %c0_2 = arith.constant 0 : index
    %1 = vector.load %arg2[%c0_1, %c0_2] : memref<16x192xf32, #tpu.memory_space<vmem>>, vector<16x192xf32>
    %cst = arith.constant dense<0.000000e+00> : vector<128x192xf32>
    %2 = tpu.matmul %0, %1, %cst {dimension_numbers = #tpu.dot_dimension_numbers<[1], [0], [0], [1], [0, 0, 1, 1], [], []>} : vector<128x16xf32>, vector<16x192xf32>, vector<128x192xf32> -> vector<128x192xf32>
    %c0_3 = arith.constant 0 : index
    %c0_4 = arith.constant 0 : index
    %3 = vector.load %arg3[%c0_3, %c0_4] : memref<1x192xf32, #tpu.memory_space<vmem>>, vector<1x192xf32>
    %4 = vector.broadcast %3 : vector<1x192xf32> to vector<128x192xf32>
    %5 = arith.addf %2, %4 : vector<128x192xf32>
    %6 = arith.truncf %5 : vector<128x192xf32> to vector<128x192xbf16>
    %c0_5 = arith.constant 0 : index
    %c0_6 = arith.constant 0 : index
    %7 = vector.load %arg4[%c0_5, %c0_6] : memref<128x192xbf16, #tpu.memory_space<vmem>>, vector<128x192xbf16>
    tpu.vector_store %arg4[%c0_5, %c0_6], %6 {strides = array<i32>} : memref<128x192xbf16, #tpu.memory_space<vmem>>, vector<128x192xbf16>,
    return
  }
  func.func @transform_0(%arg0: i32) -> (i32, i32) {
    %c0_i32 = arith.constant 0 : i32
    %c0_i32_0 = arith.constant 0 : i32
    return %arg0, %c0_i32 : i32, i32
  }
  func.func @transform_1(%arg0: i32) -> (i32, i32) {
    %c0_i32 = arith.constant 0 : i32
    %c0_i32_0 = arith.constant 0 : i32
    %c0_i32_1 = arith.constant 0 : i32
    return %c0_i32, %c0_i32_0 : i32, i32
  }
  func.func @transform_2(%arg0: i32) -> (i32, i32) {
    %c0_i32 = arith.constant 0 : i32
    %c0_i32_0 = arith.constant 0 : i32
    %c0_i32_1 = arith.constant 0 : i32
    return %c0_i32, %c0_i32_0 : i32, i32
  }
  func.func @transform_3(%arg0: i32) -> (i32, i32) {
    %c0_i32 = arith.constant 0 : i32
    %c0_i32_0 = arith.constant 0 : i32
    return %arg0, %c0_i32 : i32, i32
  }
}

</mosaic_0001>

<llo_original>
// kernel: tpu_custom_call.1
$region0: #{tpu_custom_call.1}
  #allocation0 [shape = 'u32[]', space=smem, size = 0x4, offset = 0x4, fixed_abs, tag = 'smem constant byte address 0x4 - core index']
  #allocation1 [shape = 'u32[144,128]{1,0:T(1,128)}', space=vmem, size = 0x12000, scoped, tag = 'internal scratch']
  %s0 = inlined_call_operand.vmem [shape: f32[256,16], index: 0, kind: input, shape index: {}]
  %s1 = inlined_call_operand.vmem [shape: f32[16,192], index: 1, kind: input, shape index: {}]
  %s2 = inlined_call_operand.vmem [shape: f32[1,192], index: 2, kind: input, shape index: {}]
  %s3 = inlined_call_operand.vmem [shape: bf16[256,192], index: 3, kind: output, shape index: {}]
  %s4 = sld [smem:[#allocation0]]
  $region45: #{tpu_custom_call.1} parent=0
    _
  %s6 = ssub.s32 1, %s4
  %s7 = scalar_select 0, %s6, %s4
  loop: start=0, step=1, limit=4
  $region2: #{tpu_custom_call.1} parent=0 // loop_pre_header
    _
  $region3: #{tpu_custom_call.1} parent=0 // loop_header
    %s9 = sphi 0, %s13
    %p10 = scmp.ge.s32.totalorder %s9, 4
    %s19 = sphi 0, %s21
    %s22 = sphi 0, %s19
    %s23 = sphi 0, %s22
    %s39 = sphi 0, %s23
    %s43 = sphi 0, %s43
    %s45 = sphi 0, %s43
    %s46 = sphi 0, %s45
    %s60 = sphi 0, %s46
    %s64 = sphi 0, %s64
    %s66 = sphi 0, %s64
    %s67 = sphi 0, %s66
    %s81 = sphi 0, %s67
    %s87 = sphi 0, %s89
    %s90 = sphi 0, %s87
    %s91 = sphi 0, %s90
    %s107 = sphi 0, %s91
  $region4: #{tpu_custom_call.1} parent=0 // loop_header_branch
    %12 = sbr.rel (%p10) target = $region8
  $region5: #{tpu_custom_call.1} parent=0 // loop_body
    %s14 = ssub.s32 %s9, 1
    %s15 = ssub.s32 %s9, 2
    %s16 = sadd.s32 %s9, 1
    %s17 = ssub.s32 %s9, %s16
    %p18 = scmp.eq.s32.totalorder %s17, 0
    %s20 = sadd.s32 %s19, 1
    %s21 = scalar_select %p18, %s19, %s20
    %p24 = pneg %p18
    %p25 = scmp.eq.s32.totalorder %s9, 1
    %p26 = por %p24, %p25
    %p27 = scmp.ne.s32.totalorder %s19, %s22
    %p28 = scmp.eq.s32.totalorder %s9, 0
    %p29 = por %p27, %p28
    %p30 = scmp.ne.s32.totalorder %s19, %s22
    %p31 = scmp.eq.s32.totalorder %s14, 1
    %p32 = por %p30, %p31
    %p33 = scmp.ne.s32.totalorder %s22, %s23
    %p34 = scmp.eq.s32.totalorder %s14, 0
    %p35 = por %p33, %p34
    %p36 = scmp.ne.s32.totalorder %s22, %s23
    %p37 = scmp.eq.s32.totalorder %s15, 1
    %p38 = por %p36, %p37
    %p40 = scmp.ne.s32.totalorder %s23, %s39
    %p41 = scmp.eq.s32.totalorder %s15, 0
    %p42 = por %p40, %p41
    %s44 = sadd.s32 %s43, 1
    %p47 = scmp.eq.s32.totalorder %s9, 1
    %p48 = scmp.ne.s32.totalorder %s43, %s45
    %p49 = scmp.eq.s32.totalorder %s9, 0
    %p50 = por %p48, %p49
    %p51 = scmp.ne.s32.totalorder %s43, %s45
    %p52 = scmp.eq.s32.totalorder %s14, 1
    %p53 = por %p51, %p52
    %p54 = scmp.ne.s32.totalorder %s45, %s46
    %p55 = scmp.eq.s32.totalorder %s14, 0
    %p56 = por %p54, %p55
    %p57 = scmp.ne.s32.totalorder %s45, %s46
    %p58 = scmp.eq.s32.totalorder %s15, 1
    %p59 = por %p57, %p58
    %p61 = scmp.ne.s32.totalorder %s46, %s60
    %p62 = scmp.eq.s32.totalorder %s15, 0
    %p63 = por %p61, %p62
    %s65 = sadd.s32 %s64, 1
    %p68 = scmp.eq.s32.totalorder %s9, 1
    %p69 = scmp.ne.s32.totalorder %s64, %s66
    %p70 = scmp.eq.s32.totalorder %s9, 0
    %p71 = por %p69, %p70
    %p72 = scmp.ne.s32.totalorder %s64, %s66
    %p73 = scmp.eq.s32.totalorder %s14, 1
    %p74 = por %p72, %p73
    %p75 = scmp.ne.s32.totalorder %s66, %s67
    %p76 = scmp.eq.s32.totalorder %s14, 0
    %p77 = por %p75, %p76
    %p78 = scmp.ne.s32.totalorder %s66, %s67
    %p79 = scmp.eq.s32.totalorder %s15, 1
    %p80 = por %p78, %p79
    %p82 = scmp.ne.s32.totalorder %s67, %s81
    %p83 = scmp.eq.s32.totalorder %s15, 0
    %p84 = por %p82, %p83
    %s85 = ssub.s32 %s9, %s16
    %p86 = scmp.eq.s32.totalorder %s85, 0
    %s88 = sadd.s32 %s87, 1
    %s89 = scalar_select %p86, %s87, %s88
    %p92 = pneg %p86
    %p93 = scmp.eq.s32.totalorder %s9, 1
    %p94 = por %p92, %p93
    %p95 = scmp.ne.s32.totalorder %s87, %s90
    %p96 = scmp.eq.s32.totalorder %s9, 0
    %p97 = por %p95, %p96
    %p98 = scmp.ne.s32.totalorder %s87, %s90
    %p99 = scmp.eq.s32.totalorder %s14, 1
    %p100 = por %p98, %p99
    %p101 = scmp.ne.s32.totalorder %s90, %s91
    %p102 = scmp.eq.s32.totalorder %s14, 0
    %p103 = por %p101, %p102
    %p104 = scmp.ne.s32.totalorder %s90, %s91
    %p105 = scmp.eq.s32.totalorder %s15, 1
    %p106 = por %p104, %p105
    %p108 = scmp.ne.s32.totalorder %s91, %s107
    %p109 = scmp.eq.s32.totalorder %s15, 0
    %p110 = por %p108, %p109
    %p111 = scmp.le.s32.totalorder 1, %s9
    %p112 = scmp.lt.s32.totalorder %s9, 3
    %p113 = pnand %p111, %p112
    %p114 = pneg %p113
    // Predicated region
    $region9: #{tpu_custom_call.1} parent=5 // pred_check
      _
    $region10: #{tpu_custom_call.1} parent=5 // pred_check_branch
      %116 = sbr.rel (%p113) target = $region12
    $region11: #{tpu_custom_call.1} parent=5 // pred_region
      %s117 = ssub.s32 %s9, 1
      // Predicated region
      $region13: #{tpu_custom_call.1} parent=11 // pred_check
        %p118 = pneg %p56
      $region14: #{tpu_custom_call.1} parent=11 // pred_check_branch
        %120 = sbr.rel (%p118) target = $region16
      $region15: #{tpu_custom_call.1} parent=11 // pred_region
        _
      $region16: #{tpu_custom_call.1} parent=11 // pred_fallthru
        _
      // Predicated region
      $region17: #{tpu_custom_call.1} parent=11 // pred_check
        %p121 = pneg %p77
      $region18: #{tpu_custom_call.1} parent=11 // pred_check_branch
        %123 = sbr.rel (%p121) target = $region20
      $region19: #{tpu_custom_call.1} parent=11 // pred_region
        _
      $region20: #{tpu_custom_call.1} parent=11 // pred_fallthru
        _
    $region12: #{tpu_custom_call.1} parent=5 // pred_fallthru
      _
    %p124 = scmp.lt.s32.totalorder %s9, 2
    // Predicated region
    $region21: #{tpu_custom_call.1} parent=5 // pred_check
      %p125 = pneg %p124
    $region22: #{tpu_custom_call.1} parent=5 // pred_check_branch
      %127 = sbr.rel (%p125) target = $region24
    $region23: #{tpu_custom_call.1} parent=5 // pred_region
      // Predicated region
      $region25: #{tpu_custom_call.1} parent=23 // pred_check
        %p128 = pneg %p29
      $region26: #{tpu_custom_call.1} parent=23 // pred_check_branch
        %130 = sbr.rel (%p128) target = $region28
      $region27: #{tpu_custom_call.1} parent=23 // pred_region
        %s131 = smul.u32 16, %s9
        %p132 = scmp.lt.s32.totalorder %s131, 31
        %s133 = scalar_select %p132, %s131, 31
        %s134 = smul.addr %s133, 8
        %s135 = scalar_lea.vmem %s0, %s134
        %s136 = smul.u32 16, %s9
      $region28: #{tpu_custom_call.1} parent=23 // pred_fallthru
        _
    $region24: #{tpu_custom_call.1} parent=5 // pred_fallthru
      _
    %p137 = scmp.le.s32.totalorder 1, %s9
    %p138 = scmp.lt.s32.totalorder %s9, 3
    %p139 = pnand %p137, %p138
    %p140 = pneg %p139
    // Predicated region
    $region29: #{tpu_custom_call.1} parent=5 // pred_check
      _
    $region30: #{tpu_custom_call.1} parent=5 // pred_check_branch
      %142 = sbr.rel (%p139) target = $region32
    $region31: #{tpu_custom_call.1} parent=5 // pred_region
      %s143 = ssub.s32 %s9, 1
      %s144 = smul.u32 16, %s14
      %p145 = scmp.lt.s32.totalorder %s144, 31
      %s146 = scalar_select %p145, %s144, 31
      %s147 = smul.addr %s146, 8
      %s148 = scalar_lea.vmem %s0, %s147
      %p149 = pneg %p35
      %p150 = pneg %p32
      %p151 = pneg %p56
      %p152 = pneg %p53
      %p153 = pneg %p77
      %p154 = pneg %p74
      %p155 = pneg %p103
      %p156 = pneg %p100
      %s157 = smul.u32 16, %s14
      %p158 = scmp.lt.s32.totalorder %s157, 31
      %s159 = scalar_select %p158, %s157, 31
      %s160 = smul.addr %s159, 2
      %s161 = smul.addr %s160, 4
      %s162 = scalar_lea.vmem %s3, %s161
      %s163 = smul.u32 16, %s14
      %p164 = scmp.lt.s32.totalorder %s163, 31
      %s165 = scalar_select %p164, %s163, 31
      %s166 = smul.addr %s165, 8
      %s167 = scalar_lea.vmem %s0, %s166
      %s168 = smul.u32 16, %s14
      %s169 = smul.u32 16, %s14
      %p170 = scmp.lt.s32.totalorder %s169, 31
      %s171 = scalar_select %p170, %s169, 31
      %s172 = smul.addr %s171, 2
      %s173 = smul.addr %s172, 4
      %s174 = scalar_lea.vmem %s3, %s173
      %s175 = smul.u32 16, %s14
      %v176 = vld [vmem:[%s167] sm:$0xff]
      %v177 = vld [vmem:[%s167 + $0x8] sm:$0xff]
      %v178 = vld [vmem:[%s167 + $0x10] sm:$0xff]
      %v179 = vld [vmem:[%s167 + $0x18] sm:$0xff]
      %v180 = vld [vmem:[%s167 + $0x20] sm:$0xff]
      %v181 = vld [vmem:[%s167 + $0x28] sm:$0xff]
      %v182 = vld [vmem:[%s167 + $0x30] sm:$0xff]
      %v183 = vld [vmem:[%s167 + $0x38] sm:$0xff]
      %v184 = vld [vmem:[%s167 + $0x40] sm:$0xff]
      %v185 = vld [vmem:[%s167 + $0x48] sm:$0xff]
      %v186 = vld [vmem:[%s167 + $0x50] sm:$0xff]
      %v187 = vld [vmem:[%s167 + $0x58] sm:$0xff]
      %v188 = vld [vmem:[%s167 + $0x60] sm:$0xff]
      %v189 = vld [vmem:[%s167 + $0x68] sm:$0xff]
      %v190 = vld [vmem:[%s167 + $0x70] sm:$0xff]
      %v191 = vld [vmem:[%s167 + $0x78] sm:$0xff]
      %v192 = vld [vmem:[%s1] sm:$0xff]
      %v193 = vld [vmem:[%s1 + $0x8] sm:$0xff]
      %v194 = vld [vmem:[%s1 + $0x10] sm:$0xff]
      %v195 = vld [vmem:[%s1 + $0x18] sm:$0xff]
      %v196 = vld [vmem:[%s2] sm:$0x3]
      %v198 = vlaneseq
      %v199 = vshrl.u32 %v198, 7
      %v200 = vsub.s32 0, %v199
      %v201 = vrot.slane %v196, %v200
      %v202 = vlaneseq
      %v203 = vshrl.u32 %v202, 7
      %v204 = vsub.s32 1, %v203
      %v205 = vrot.slane %v196, %v204
      %vm208 = vcmask 130048
      %v210 = vsel %vm208, %v176, 0
      %v213 = vsel %vm208, %v177, 0
      %v216 = vsel %vm208, %v178, 0
      %v219 = vsel %vm208, %v179, 0
      %v222 = vsel %vm208, %v180, 0
      %v225 = vsel %vm208, %v181, 0
      %v228 = vsel %vm208, %v182, 0
      %v231 = vsel %vm208, %v183, 0
      %v234 = vsel %vm208, %v184, 0
      %v237 = vsel %vm208, %v185, 0
      %v240 = vsel %vm208, %v186, 0
      %v243 = vsel %vm208, %v187, 0
      %v246 = vsel %vm208, %v188, 0
      %v249 = vsel %vm208, %v189, 0
      %v252 = vsel %vm208, %v190, 0
      %v255 = vsel %vm208, %v191, 0
      %257 = vmatprep.subr.mxu0 %v193
      %258 = vmatpush1.msra.mxu0 %v192
      %259 = vmatprep.subr.mxu0 %v195
      %260 = vmatpush1.msra.mxu0 %v194
      %261 = vmatprep.subr.mxu0 0.0
      %262 = vmatpush1.msra.mxu0 0.0
      %263 = vmatprep.subr.mxu0 0.0
      %264 = vmatpush1.msra.mxu0 0.0
      %265 = vmatprep.subr.mxu0 0.0
      %266 = vmatpush1.msra.mxu0 0.0
      %267 = vmatprep.subr.mxu0 0.0
      %268 = vmatpush1.msra.mxu0 0.0
      %269 = vmatprep.subr.mxu0 0.0
      %270 = vmatpush1.msra.mxu0 0.0
      %271 = vmatprep.subr.mxu0 0.0
      %272 = vmatpush1.msra.mxu0 0.0
      %273 = vmatprep.subr.mxu0 0.0
      %274 = vmatpush1.msra.mxu0 0.0
      %275 = vmatprep.subr.mxu0 0.0
      %276 = vmatpush1.msra.mxu0 0.0
      %277 = vmatprep.subr.mxu0 0.0
      %278 = vmatpush1.msra.mxu0 0.0
      %279 = vmatprep.subr.mxu0 0.0
      %280 = vmatpush1.msra.mxu0 0.0
      %281 = vmatprep.subr.mxu0 0.0
      %282 = vmatpush1.msra.mxu0 0.0
      %283 = vmatprep.subr.mxu0 0.0
      %284 = vmatpush1.msra.mxu0 0.0
      %285 = vmatprep.subr.mxu0 0.0
      %286 = vmatpush1.msra.mxu0 0.0
      %287 = vmatprep.subr.mxu0 0.0
      %288 = vmatpush1.msra.mxu0 0.0
      %289 = vmatprep.subr.mxu0 0.0
      %290 = vmatpush1.msra.mxu0 0.0
      %291 = vmatprep.subr.mxu0 0.0
      %292 = vmatpush1.msra.mxu0 0.0
      %293 = vmatprep.subr.mxu0 0.0
      %294 = vmatpush1.msra.mxu0 0.0
      %295 = vmatprep.subr.mxu0 0.0
      %296 = vmatpush1.msra.mxu0 0.0
      %297 = vmatprep.subr.mxu0 0.0
      %298 = vmatpush1.msra.mxu0 0.0
      %299 = vmatprep.subr.mxu0 0.0
      %300 = vmatpush1.msra.mxu0 0.0
      %301 = vmatprep.subr.mxu0 0.0
      %302 = vmatpush1.msra.mxu0 0.0
      %303 = vmatprep.subr.mxu0 0.0
      %304 = vmatpush1.msra.mxu0 0.0
      %305 = vmatprep.subr.mxu0 0.0
      %306 = vmatpush1.msra.mxu0 0.0
      %307 = vmatprep.subr.mxu0 0.0
      %308 = vmatpush1.msra.mxu0 0.0
      %309 = vmatprep.subr.mxu0 0.0
      %310 = vmatpush1.msra.mxu0 0.0
      %311 = vmatprep.subr.mxu0 0.0
      %312 = vmatpush1.msra.mxu0 0.0
      %313 = vmatprep.subr.mxu0 0.0
      %314 = vmatpush1.msra.mxu0 0.0
      %315 = vmatprep.subr.mxu0 0.0
      %316 = vmatpush1.msra.mxu0 0.0
      %317 = vmatprep.subr.mxu0 0.0
      %318 = vmatpush1.msra.mxu0 0.0
      %319 = vmatprep.subr.mxu0 0.0
      %320 = vmatpush1.msra.mxu0 0.0
      %321 = vmatprep.mubr.f32.mxu0 0.0
      %322 = vmatmul.mubr.f32.gmra.mrb[0].mxu0 %v210
      %v323 = vpop.f32.mrb[0].mxu0
      %v324 = vadd.f32 %v201, %v323
      %v325 = vpop.f32.mrb[0].mxu0
      %v326 = vadd.f32 %v205, %v325
      %327 = vmatprep.mubr.f32.mxu0 0.0
      %328 = vmatmul.mubr.f32.gmra.mrb[0].mxu0 %v213
      %v329 = vpop.f32.mrb[0].mxu0
      %v330 = vadd.f32 %v201, %v329
      %v331 = vpop.f32.mrb[0].mxu0
      %v332 = vadd.f32 %v205, %v331
      %333 = vmatprep.mubr.f32.mxu0 0.0
      %334 = vmatmul.mubr.f32.gmra.mrb[0].mxu0 %v216
      %v335 = vpop.f32.mrb[0].mxu0
      %v336 = vadd.f32 %v201, %v335
      %v337 = vpop.f32.mrb[0].mxu0
      %v338 = vadd.f32 %v205, %v337
      %339 = vmatprep.mubr.f32.mxu0 0.0
      %340 = vmatmul.mubr.f32.gmra.mrb[0].mxu0 %v219
      %v341 = vpop.f32.mrb[0].mxu0
      %v342 = vadd.f32 %v201, %v341
      %v343 = vpop.f32.mrb[0].mxu0
      %v344 = vadd.f32 %v205, %v343
      %345 = vmatprep.mubr.f32.mxu0 0.0
      %346 = vmatmul.mubr.f32.gmra.mrb[0].mxu0 %v222
      %v347 = vpop.f32.mrb[0].mxu0
      %v348 = vadd.f32 %v201, %v347
      %v349 = vpop.f32.mrb[0].mxu0
      %v350 = vadd.f32 %v205, %v349
      %351 = vmatprep.mubr.f32.mxu0 0.0
      %352 = vmatmul.mubr.f32.gmra.mrb[0].mxu0 %v225
      %v353 = vpop.f32.mrb[0].mxu0
      %v354 = vadd.f32 %v201, %v353
      %v355 = vpop.f32.mrb[0].mxu0
      %v356 = vadd.f32 %v205, %v355
      %357 = vmatprep.mubr.f32.mxu0 0.0
      %358 = vmatmul.mubr.f32.gmra.mrb[0].mxu0 %v228
      %v359 = vpop.f32.mrb[0].mxu0
      %v360 = vadd.f32 %v201, %v359
      %v361 = vpop.f32.mrb[0].mxu0
      %v362 = vadd.f32 %v205, %v361
      %363 = vmatprep.mubr.f32.mxu0 0.0
      %364 = vmatmul.mubr.f32.gmra.mrb[0].mxu0 %v231
      %v365 = vpop.f32.mrb[0].mxu0
      %v366 = vadd.f32 %v201, %v365
      %v367 = vpop.f32.mrb[0].mxu0
      %v368 = vadd.f32 %v205, %v367
      %369 = vmatprep.mubr.f32.mxu0 0.0
      %370 = vmatmul.mubr.f32.gmra.mrb[0].mxu0 %v234
      %v371 = vpop.f32.mrb[0].mxu0
      %v372 = vadd.f32 %v201, %v371
      %v373 = vpop.f32.mrb[0].mxu0
      %v374 = vadd.f32 %v205, %v373
      %375 = vmatprep.mubr.f32.mxu0 0.0
      %376 = vmatmul.mubr.f32.gmra.mrb[0].mxu0 %v237
      %v377 = vpop.f32.mrb[0].mxu0
      %v378 = vadd.f32 %v201, %v377
      %v379 = vpop.f32.mrb[0].mxu0
      %v380 = vadd.f32 %v205, %v379
      %381 = vmatprep.mubr.f32.mxu0 0.0
      %382 = vmatmul.mubr.f32.gmra.mrb[0].mxu0 %v240
      %v383 = vpop.f32.mrb[0].mxu0
      %v384 = vadd.f32 %v201, %v383
      %v385 = vpop.f32.mrb[0].mxu0
      %v386 = vadd.f32 %v205, %v385
      %387 = vmatprep.mubr.f32.mxu0 0.0
      %388 = vmatmul.mubr.f32.gmra.mrb[0].mxu0 %v243
      %v389 = vpop.f32.mrb[0].mxu0
      %v390 = vadd.f32 %v201, %v389
      %v391 = vpop.f32.mrb[0].mxu0
      %v392 = vadd.f32 %v205, %v391
      %393 = vmatprep.mubr.f32.mxu0 0.0
      %394 = vmatmul.mubr.f32.gmra.mrb[0].mxu0 %v246
      %v395 = vpop.f32.mrb[0].mxu0
      %v396 = vadd.f32 %v201, %v395
      %v397 = vpop.f32.mrb[0].mxu0
      %v398 = vadd.f32 %v205, %v397
      %399 = vmatprep.mubr.f32.mxu0 0.0
      %400 = vmatmul.mubr.f32.gmra.mrb[0].mxu0 %v249
      %v401 = vpop.f32.mrb[0].mxu0
      %v402 = vadd.f32 %v201, %v401
      %v403 = vpop.f32.mrb[0].mxu0
      %v404 = vadd.f32 %v205, %v403
      %405 = vmatprep.mubr.f32.mxu0 0.0
      %406 = vmatmul.mubr.f32.gmra.mrb[0].mxu0 %v252
      %v407 = vpop.f32.mrb[0].mxu0
      %v408 = vadd.f32 %v201, %v407
      %v409 = vpop.f32.mrb[0].mxu0
      %v410 = vadd.f32 %v205, %v409
      %411 = vmatprep.mubr.f32.mxu0 0.0
      %412 = vmatmul.mubr.f32.gmra.mrb[0].mxu0 %v255
      %v413 = vpop.f32.mrb[0].mxu0
      %v414 = vadd.f32 %v201, %v413
      %v415 = vpop.f32.mrb[0].mxu0
      %v416 = vadd.f32 %v205, %v415
      %417 = vdwg.mxu0
      %v418 = vpack.c.bf16 %v330, %v324
      %v419 = vpack.c.bf16 %v332, %v326
      %v420 = vpack.c.bf16 %v342, %v336
      %v421 = vpack.c.bf16 %v344, %v338
      %v422 = vpack.c.bf16 %v354, %v348
      %v423 = vpack.c.bf16 %v356, %v350
      %v424 = vpack.c.bf16 %v366, %v360
      %v425 = vpack.c.bf16 %v368, %v362
      %v426 = vpack.c.bf16 %v378, %v372
      %v427 = vpack.c.bf16 %v380, %v374
      %v428 = vpack.c.bf16 %v390, %v384
      %v429 = vpack.c.bf16 %v392, %v386
      %v430 = vpack.c.bf16 %v402, %v396
      %v431 = vpack.c.bf16 %v404, %v398
      %v432 = vpack.c.bf16 %v414, %v408
      %v433 = vpack.c.bf16 %v416, %v410
      %v450 = vunpack.c.l.b16 %v418
      %v451 = vunpack.c.l.b16 %v419
      %v452 = vunpack.c.h.b16 %v418
      %v453 = vunpack.c.h.b16 %v419
      %v454 = vunpack.c.l.b16 %v420
      %v455 = vunpack.c.l.b16 %v421
      %v456 = vunpack.c.h.b16 %v420
      %v457 = vunpack.c.h.b16 %v421
      %v458 = vunpack.c.l.b16 %v422
      %v459 = vunpack.c.l.b16 %v423
      %v460 = vunpack.c.h.b16 %v422
      %v461 = vunpack.c.h.b16 %v423
      %v462 = vunpack.c.l.b16 %v424
      %v463 = vunpack.c.l.b16 %v425
      %v464 = vunpack.c.h.b16 %v424
      %v465 = vunpack.c.h.b16 %v425
      %v466 = vunpack.c.l.b16 %v426
      %v467 = vunpack.c.l.b16 %v427
      %v468 = vunpack.c.h.b16 %v426
      %v469 = vunpack.c.h.b16 %v427
      %v470 = vunpack.c.l.b16 %v428
      %v471 = vunpack.c.l.b16 %v429
      %v472 = vunpack.c.h.b16 %v428
      %v473 = vunpack.c.h.b16 %v429
      %v474 = vunpack.c.l.b16 %v430
      %v475 = vunpack.c.l.b16 %v431
      %v476 = vunpack.c.h.b16 %v430
      %v477 = vunpack.c.h.b16 %v431
      %v478 = vunpack.c.l.b16 %v432
      %v479 = vunpack.c.l.b16 %v433
      %v480 = vunpack.c.h.b16 %v432
      %v481 = vunpack.c.h.b16 %v433
      %v482 = vpack.c.b16 %v451, %v450
      %v483 = vpack.c.b16 %v453, %v452
      %v484 = vpack.c.b16 %v455, %v454
      %v485 = vpack.c.b16 %v457, %v456
      %v486 = vpack.c.b16 %v459, %v458
      %v487 = vpack.c.b16 %v461, %v460
      %v488 = vpack.c.b16 %v463, %v462
      %v489 = vpack.c.b16 %v465, %v464
      %v490 = vpack.c.b16 %v467, %v466
      %v491 = vpack.c.b16 %v469, %v468
      %v492 = vpack.c.b16 %v471, %v470
      %v493 = vpack.c.b16 %v473, %v472
      %v494 = vpack.c.b16 %v475, %v474
      %v495 = vpack.c.b16 %v477, %v476
      %v496 = vpack.c.b16 %v479, %v478
      %v497 = vpack.c.b16 %v481, %v480
      %vm514 = vcmask 1043456
      %vm515 = vcmask 523268
      %vm516 = vmor %vm515, %vm514
      %517 = vst.msk [vmem:[%s174] sm:$0xff] %vm516, %v482
      %518 = vst.msk [vmem:[%s174 + $0x8] sm:$0xff] %vm516, %v483
      %519 = vst.msk [vmem:[%s174 + $0x10] sm:$0xff] %vm516, %v484
      %520 = vst.msk [vmem:[%s174 + $0x18] sm:$0xff] %vm516, %v485
      %521 = vst.msk [vmem:[%s174 + $0x20] sm:$0xff] %vm516, %v486
      %522 = vst.msk [vmem:[%s174 + $0x28] sm:$0xff] %vm516, %v487
      %523 = vst.msk [vmem:[%s174 + $0x30] sm:$0xff] %vm516, %v488
      %524 = vst.msk [vmem:[%s174 + $0x38] sm:$0xff] %vm516, %v489
      %525 = vst.msk [vmem:[%s174 + $0x40] sm:$0xff] %vm516, %v490
      %526 = vst.msk [vmem:[%s174 + $0x48] sm:$0xff] %vm516, %v491
      %527 = vst.msk [vmem:[%s174 + $0x50] sm:$0xff] %vm516, %v492
      %528 = vst.msk [vmem:[%s174 + $0x58] sm:$0xff] %vm516, %v493
      %529 = vst.msk [vmem:[%s174 + $0x60] sm:$0xff] %vm516, %v494
      %530 = vst.msk [vmem:[%s174 + $0x68] sm:$0xff] %vm516, %v495
      %531 = vst.msk [vmem:[%s174 + $0x70] sm:$0xff] %vm516, %v496
      %532 = vst.msk [vmem:[%s174 + $0x78] sm:$0xff] %vm516, %v497
      %s533 = smul.u32 16, %s14
      %p534 = scmp.lt.s32.totalorder %s533, 31
      %s535 = scalar_select %p534, %s533, 31
      %s536 = smul.addr %s535, 2
      %s537 = smul.addr %s536, 4
      %s538 = scalar_lea.vmem %s3, %s537
      // Predicated region
      $region33: #{tpu_custom_call.1} parent=31 // pred_check
        %p539 = pneg %p100
      $region34: #{tpu_custom_call.1} parent=31 // pred_check_branch
        %541 = sbr.rel (%p539) target = $region36
      $region35: #{tpu_custom_call.1} parent=31 // pred_region
        %s542 = smul.u32 16, %s14
      $region36: #{tpu_custom_call.1} parent=31 // pred_fallthru
        _
    $region32: #{tpu_custom_call.1} parent=5 // pred_fallthru
      _
    %p543 = scmp.le.s32.totalorder 2, %s9
    // Predicated region
    $region37: #{tpu_custom_call.1} parent=5 // pred_check
      %p544 = pneg %p543
    $region38: #{tpu_custom_call.1} parent=5 // pred_check_branch
      %546 = sbr.rel (%p544) target = $region40
    $region39: #{tpu_custom_call.1} parent=5 // pred_region
      %s547 = ssub.s32 %s9, 2
      // Predicated region
      $region41: #{tpu_custom_call.1} parent=39 // pred_check
        %p548 = pneg %p106
      $region42: #{tpu_custom_call.1} parent=39 // pred_check_branch
        %550 = sbr.rel (%p548) target = $region44
      $region43: #{tpu_custom_call.1} parent=39 // pred_region
        %s551 = smul.u32 16, %s15
        %p552 = scmp.lt.s32.totalorder %s551, 31
        %s553 = scalar_select %p552, %s551, 31
        %s554 = smul.addr %s553, 2
        %s555 = smul.addr %s554, 4
        %s556 = scalar_lea.vmem %s3, %s555
      $region44: #{tpu_custom_call.1} parent=39 // pred_fallthru
        _
    $region40: #{tpu_custom_call.1} parent=5 // pred_fallthru
      _
  $region6: #{tpu_custom_call.1} parent=0 // loop_footer
    %s13 = sadd.s32 1, %s9
  $region7: #{tpu_custom_call.1} parent=0 // loop_footer_branch
    %8 = sbr.rel target = $region3
  $region8: #{tpu_custom_call.1} parent=0 // loop_exit
    _

</llo_original>
